<compile_context>
chip_gen: v6e
topology: v6e:2x2x1
jax: 0.10.0
libtpu: 0.0.40
codegen_flags: <defaults>
</compile_context>

<pallas_src>
import jax
import jax.numpy as jnp
from jax.experimental import pallas as pl
from jax.experimental.pallas import tpu as pltpu  # noqa: F401  (TPU backend import)


def _identity_copy_kernel(x_ref, o_ref):
    # Straight vld/vst over the full lane-dense block; no broadcast_in_dim.
    o_ref[...] = x_ref[...]


def _materializing_unsqueeze0(x: jax.Array) -> jax.Array:
    """Explicit copy-then-unsqueeze via a minimal single-block Pallas kernel."""
    G, S1, S2 = x.shape
    n = S1 * S2
    # Free, row-major-contiguous reshape outside the kernel -> lane-dense copy.
    # Keep the (G, n) 2-D view: (16, 2401) fills both (8,128) sublane groups.
    x_flat = x.reshape(G, n)

    out_flat = pl.pallas_call(
        _identity_copy_kernel,
        out_shape=jax.ShapeDtypeStruct((G, n), x.dtype),
        in_specs=[pl.BlockSpec((G, n), lambda: (0, 0))],
        out_specs=pl.BlockSpec((G, n), lambda: (0, 0)),
    )(x_flat)

    # Metadata-only ops outside the kernel (free).
    return out_flat.reshape(G, S1, S2)[None]


def unsqueeze0(x: jax.Array, force_materialize: bool = False) -> jax.Array:
    """torch.unsqueeze(x, 0).

    Default: metadata-only `x[None]` (the optimal implementation — no HBM
    traffic, no custom-call barrier, fuses with producers/consumers).
    `force_materialize=True` routes through the minimal Pallas identity-copy
    kernel, only for cases where a real copy is explicitly wanted.
    """
    if force_materialize:
        return _materializing_unsqueeze0(x)
    return x[None]


if __name__ == "__main__":
    key = jax.random.PRNGKey(0)
    # Matches the module's input: torch.randn([16, 49, 49])
    x187 = jax.random.normal(key, (16, 49, 49), dtype=jnp.float32)

    # Default (optimal) path: metadata-only unsqueeze.
    x188 = unsqueeze0(x187)
    jax.block_until_ready(x188)

    # Also exercise the Pallas identity-copy path once to verify it
    # compiles and runs cleanly on TPU.
    x188_copy = unsqueeze0(x187, force_materialize=True)
    jax.block_until_ready(x188_copy)

    # Correctness checks against the pure-JAX reference.
    ref = jnp.expand_dims(x187, 0)
    assert x188.shape == (1, 16, 49, 49), x188.shape
    assert x188.dtype == x187.dtype
    assert bool(jnp.array_equal(x188, ref))
    assert x188_copy.shape == (1, 16, 49, 49), x188_copy.shape
    assert x188_copy.dtype == x187.dtype
    assert bool(jnp.array_equal(x188_copy, ref))

    print("KERNEL_OK")
</pallas_src>

<mosaic_0001>
module attributes {stable_mosaic.version = 11 : i64} {
  func.func @_identity_copy_kernel(%arg0: memref<16x2401xf32, #tpu.memory_space<vmem>>, %arg1: memref<16x2401xf32, #tpu.memory_space<vmem>>) attributes {dimension_semantics = [], scalar_prefetch = 0 : i64, scratch_operands = 0 : i64, tpu.core_type = #tpu.core_type<tc>} {
    %c0 = arith.constant 0 : index
    %c0_0 = arith.constant 0 : index
    %0 = vector.load %arg0[%c0, %c0_0] : memref<16x2401xf32, #tpu.memory_space<vmem>>, vector<16x2401xf32>
    %c0_1 = arith.constant 0 : index
    %c0_2 = arith.constant 0 : index
    %1 = vector.load %arg1[%c0_1, %c0_2] : memref<16x2401xf32, #tpu.memory_space<vmem>>, vector<16x2401xf32>
    tpu.vector_store %arg1[%c0_1, %c0_2], %0 {strides = array<i32>} : memref<16x2401xf32, #tpu.memory_space<vmem>>, vector<16x2401xf32>,
    return
  }
}

</mosaic_0001>

<llo_original>
// kernel: tpu_custom_call.1
$region0: #{tpu_custom_call.1}
  #allocation0 [shape = 'u32[]', space=smem, size = 0x4, offset = 0x4, fixed_abs, tag = 'smem constant byte address 0x4 - core index']
  #allocation1 [shape = 'u32[144,128]{1,0:T(1,128)}', space=vmem, size = 0x12000, scoped, tag = 'internal scratch']
  %s0 = inlined_call_operand.hbm [shape: f32[16,2401], index: 0, kind: input, shape index: {}]
  %s1 = inlined_call_operand.hbm [shape: f32[16,2401], index: 1, kind: output, shape index: {}]
  %s2 = sld [smem:[#allocation0]]
  $region18: #{tpu_custom_call.1} parent=0
    _
  %s4 = ssub.s32 1, %s2
  %s5 = scalar_select 0, %s4, %s2
  $region1: #{tpu_custom_call.1} parent=0
    #allocation2 [shape = 'u8[155648]{0}', space=vmem, size = 0x26000, scoped, tag = 'input window, operand 0, single buffered']
    #allocation3 [shape = 's32[1]{0}', space=sflag, size = 0x4, scoped, tag = 'scoped memory for tpu_custom_call.1']
    #allocation4 [shape = 's32[1]{0}', space=sflag, size = 0x4, scoped, tag = 'scoped memory for tpu_custom_call.1']
    #allocation5 [shape = 'u8[155648]{0}', space=vmem, size = 0x26000, scoped, tag = 'output window, operand 0, single buffered']
    %6 = vsyncpa [#allocation3], 0
    %7 = vsyncpa [#allocation4], 0
    // Predicated region
    $region2: #{tpu_custom_call.1} parent=1 // pred_check
      _
    $region3: #{tpu_custom_call.1} parent=1 // pred_check_branch
      %9 = sbr.rel (0) target = $region5
    $region4: #{tpu_custom_call.1} parent=1 // pred_region
      %s11 = ssub.s32 4864, 4864
      %12 = vsyncadd [#allocation3], %s11
      %s13 = sshll.u32 [#allocation2], 4
      %s14 = int_to_ptr.vmem [resolvable:$true] %s13
      %19 = dma.hbm_to_vmem [thread:$0]  %s0, 4864, %s14, [#allocation3], 2432, 2432, 152
    $region5: #{tpu_custom_call.1} parent=1 // pred_fallthru
      _
    // Predicated region
    $region6: #{tpu_custom_call.1} parent=1 // pred_check
      _
    $region7: #{tpu_custom_call.1} parent=1 // pred_check_branch
      %21 = sbr.rel (0) target = $region9
    $region8: #{tpu_custom_call.1} parent=1 // pred_region
      %22 = dma.done [#allocation3], 4864
    $region9: #{tpu_custom_call.1} parent=1 // pred_fallthru
      _
    %v23 = vld [vmem:[#allocation2] sm:$0xff]
    %v24 = vld [vmem:[#allocation2 + $0x8] sm:$0xff]
    %v25 = vld [vmem:[#allocation2 + $0x10] sm:$0xff]
    %v26 = vld [vmem:[#allocation2 + $0x18] sm:$0xff]
    %v27 = vld [vmem:[#allocation2 + $0x20] sm:$0xff]
    %v28 = vld [vmem:[#allocation2 + $0x28] sm:$0xff]
    %v29 = vld [vmem:[#allocation2 + $0x30] sm:$0xff]
    %v30 = vld [vmem:[#allocation2 + $0x38] sm:$0xff]
    %v31 = vld [vmem:[#allocation2 + $0x40] sm:$0xff]
    %v32 = vld [vmem:[#allocation2 + $0x48] sm:$0xff]
    %v33 = vld [vmem:[#allocation2 + $0x50] sm:$0xff]
    %v34 = vld [vmem:[#allocation2 + $0x58] sm:$0xff]
    %v35 = vld [vmem:[#allocation2 + $0x60] sm:$0xff]
    %v36 = vld [vmem:[#allocation2 + $0x68] sm:$0xff]
    %v37 = vld [vmem:[#allocation2 + $0x70] sm:$0xff]
    %v38 = vld [vmem:[#allocation2 + $0x78] sm:$0xff]
    %v39 = vld [vmem:[#allocation2 + $0x80] sm:$0xff]
    %v40 = vld [vmem:[#allocation2 + $0x88] sm:$0xff]
    %v41 = vld [vmem:[#allocation2 + $0x90] sm:$0xff]
    %v42 = vld [vmem:[#allocation2 + $0x98] sm:$0xff]
    %v43 = vld [vmem:[#allocation2 + $0xa0] sm:$0xff]
    %v44 = vld [vmem:[#allocation2 + $0xa8] sm:$0xff]
    %v45 = vld [vmem:[#allocation2 + $0xb0] sm:$0xff]
    %v46 = vld [vmem:[#allocation2 + $0xb8] sm:$0xff]
    %v47 = vld [vmem:[#allocation2 + $0xc0] sm:$0xff]
    %v48 = vld [vmem:[#allocation2 + $0xc8] sm:$0xff]
    %v49 = vld [vmem:[#allocation2 + $0xd0] sm:$0xff]
    %v50 = vld [vmem:[#allocation2 + $0xd8] sm:$0xff]
    %v51 = vld [vmem:[#allocation2 + $0xe0] sm:$0xff]
    %v52 = vld [vmem:[#allocation2 + $0xe8] sm:$0xff]
    %v53 = vld [vmem:[#allocation2 + $0xf0] sm:$0xff]
    %v54 = vld [vmem:[#allocation2 + $0xf8] sm:$0xff]
    %v55 = vld [vmem:[#allocation2 + $0x100] sm:$0xff]
    %v56 = vld [vmem:[#allocation2 + $0x108] sm:$0xff]
    %v57 = vld [vmem:[#allocation2 + $0x110] sm:$0xff]
    %v58 = vld [vmem:[#allocation2 + $0x118] sm:$0xff]
    %v59 = vld [vmem:[#allocation2 + $0x120] sm:$0xff]
    %v60 = vld [vmem:[#allocation2 + $0x128] sm:$0xff]
    %61 = vst [vmem:[#allocation5] sm:$0xff] %v23
    %62 = vst [vmem:[#allocation5 + $0x8] sm:$0xff] %v24
    %63 = vst [vmem:[#allocation5 + $0x10] sm:$0xff] %v25
    %64 = vst [vmem:[#allocation5 + $0x18] sm:$0xff] %v26
    %65 = vst [vmem:[#allocation5 + $0x20] sm:$0xff] %v27
    %66 = vst [vmem:[#allocation5 + $0x28] sm:$0xff] %v28
    %67 = vst [vmem:[#allocation5 + $0x30] sm:$0xff] %v29
    %68 = vst [vmem:[#allocation5 + $0x38] sm:$0xff] %v30
    %69 = vst [vmem:[#allocation5 + $0x40] sm:$0xff] %v31
    %70 = vst [vmem:[#allocation5 + $0x48] sm:$0xff] %v32
    %71 = vst [vmem:[#allocation5 + $0x50] sm:$0xff] %v33
    %72 = vst [vmem:[#allocation5 + $0x58] sm:$0xff] %v34
    %73 = vst [vmem:[#allocation5 + $0x60] sm:$0xff] %v35
    %74 = vst [vmem:[#allocation5 + $0x68] sm:$0xff] %v36
    %75 = vst [vmem:[#allocation5 + $0x70] sm:$0xff] %v37
    %76 = vst [vmem:[#allocation5 + $0x78] sm:$0xff] %v38
    %77 = vst [vmem:[#allocation5 + $0x80] sm:$0xff] %v39
    %78 = vst [vmem:[#allocation5 + $0x88] sm:$0xff] %v40
    %vm79 = vcmask 793600
    %80 = vst.msk [vmem:[#allocation5 + $0x90] sm:$0xff] %vm79, %v41
    %81 = vst [vmem:[#allocation5 + $0x98] sm:$0xff] %v42
    %82 = vst [vmem:[#allocation5 + $0xa0] sm:$0xff] %v43
    %83 = vst [vmem:[#allocation5 + $0xa8] sm:$0xff] %v44
    %84 = vst [vmem:[#allocation5 + $0xb0] sm:$0xff] %v45
    %85 = vst [vmem:[#allocation5 + $0xb8] sm:$0xff] %v46
    %86 = vst [vmem:[#allocation5 + $0xc0] sm:$0xff] %v47
    %87 = vst [vmem:[#allocation5 + $0xc8] sm:$0xff] %v48
    %88 = vst [vmem:[#allocation5 + $0xd0] sm:$0xff] %v49
    %89 = vst [vmem:[#allocation5 + $0xd8] sm:$0xff] %v50
    %90 = vst [vmem:[#allocation5 + $0xe0] sm:$0xff] %v51
    %91 = vst [vmem:[#allocation5 + $0xe8] sm:$0xff] %v52
    %92 = vst [vmem:[#allocation5 + $0xf0] sm:$0xff] %v53
    %93 = vst [vmem:[#allocation5 + $0xf8] sm:$0xff] %v54
    %94 = vst [vmem:[#allocation5 + $0x100] sm:$0xff] %v55
    %95 = vst [vmem:[#allocation5 + $0x108] sm:$0xff] %v56
    %96 = vst [vmem:[#allocation5 + $0x110] sm:$0xff] %v57
    %97 = vst [vmem:[#allocation5 + $0x118] sm:$0xff] %v58
    %98 = vst [vmem:[#allocation5 + $0x120] sm:$0xff] %v59
    %99 = vst.msk [vmem:[#allocation5 + $0x128] sm:$0xff] %vm79, %v60
    // Predicated region
    $region10: #{tpu_custom_call.1} parent=1 // pred_check
      _
    $region11: #{tpu_custom_call.1} parent=1 // pred_check_branch
      %101 = sbr.rel (0) target = $region13
    $region12: #{tpu_custom_call.1} parent=1 // pred_region
      %s103 = ssub.s32 4864, 4864
      %104 = vsyncadd [#allocation4], %s103
      %s105 = sshll.u32 [#allocation5], 4
      %s106 = int_to_ptr.vmem [resolvable:$true] %s105
      %111 = dma.vmem_to_hbm [thread:$0]  %s106, 4864, %s1, [#allocation4], 2432, 2432, 152
    $region13: #{tpu_custom_call.1} parent=1 // pred_fallthru
      _
    // Predicated region
    $region14: #{tpu_custom_call.1} parent=1 // pred_check
      _
    $region15: #{tpu_custom_call.1} parent=1 // pred_check_branch
      %113 = sbr.rel (0) target = $region17
    $region16: #{tpu_custom_call.1} parent=1 // pred_region
      %114 = dma.done [#allocation4], 4864
    $region17: #{tpu_custom_call.1} parent=1 // pred_fallthru
      _
    %115 = vsyncpa [#allocation3], 1
    %116 = vsyncpa [#allocation4], 1

</llo_original>
